<compile_context>
chip_gen: v7x
topology: tpu7x:2x2x1
jax: 0.10.0
libtpu: 0.0.40
codegen_flags: <defaults>
</compile_context>

<pallas_src>
import functools

import jax
import jax.numpy as jnp
import numpy as np
from jax.experimental import pallas as pl
from jax.experimental.pallas import tpu as pltpu


def _feature_fusion_kernel(x_ref, w_ref, scale_ref, shift_ref, mask_ref, o_ref, *, width):
    # x_ref:     (B, Cin, H*W)   raw input block, NCHW with flattened spatial dims
    # w_ref:     (9, Cout, Cin)  conv weight, tap-major: w_ref[kh*3+kw] == W[:, :, kh, kw]
    # scale_ref: (Cin, 1) f32    folded BatchNorm scale  (gamma / sqrt(var + eps))
    # shift_ref: (Cin, 1) f32    folded BatchNorm shift  (beta - mean * scale)
    # mask_ref:  (9, H*W) f32    per-tap validity mask (zero where the 3x3 window pads)
    # o_ref:     (B, Cout, H*W)  output block (NCHW, flattened spatial)
    B, Cin, HW = x_ref.shape
    Cout = o_ref.shape[1]

    # BatchNorm (folded per-channel affine) + ReLU, in f32, once for the whole block.
    x = x_ref[...].astype(jnp.float32)                                   # (B, Cin, HW)
    act = jnp.maximum(x * scale_ref[...][None] + shift_ref[...][None], 0.0)

    accs = [jnp.zeros((Cout, HW), jnp.float32) for _ in range(B)]
    for kh in range(3):
        for kw in range(3):
            t = kh * 3 + kw
            s = (kh - 1) * width + (kw - 1)          # flat-index offset of this tap
            if s == 0:
                tap_blk = act                        # center tap: no shift, mask == 1
            else:
                rolled = pltpu.roll(act, shift=(-s) % HW, axis=2)        # XLU rotation
                tap_blk = rolled * mask_ref[pl.ds(t, 1), :][None]        # zero pad pixels
            w_t = w_ref[t]                           # (Cout, Cin), resident in VMEM
            for b in range(B):
                accs[b] = accs[b] + jnp.dot(
                    w_t, tap_blk[b].astype(w_t.dtype),
                    preferred_element_type=jnp.float32)

    for b in range(B):
        o_ref[b] = accs[b].astype(o_ref.dtype)       # (Cout, HW): lane-dense store


def feature_fusion(x_nchw, conv_w_oihw, bn_gamma, bn_beta, eps=1e-5, b_tile=None):
    """Forward of FeatureFusion: BN(batch stats) -> ReLU -> 3x3 conv (pad=1, no bias).

    Inputs/outputs are NCHW, exactly like the PyTorch module.
    """
    N, Cin, H, W = x_nchw.shape
    Cout = conv_w_oihw.shape[0]
    HW = H * W

    # BatchNorm2d (training mode): biased batch statistics over (N, H, W), f32 accumulation.
    xf = x_nchw.astype(jnp.float32)
    mean = jnp.mean(xf, axis=(0, 2, 3))
    var = jnp.mean(jnp.square(xf - mean[None, :, None, None]), axis=(0, 2, 3))
    scale = bn_gamma.astype(jnp.float32) / jnp.sqrt(var + eps)
    shift = bn_beta.astype(jnp.float32) - mean * scale

    # Flat-spatial NCHW view: contiguous collapse of trailing dims (no data movement).
    x_flat = x_nchw.reshape(N, Cin, HW)

    # Conv weight OIHW -> tap-major (9, Cout, Cin); bf16 MXU operands when input is bf16.
    mm_dtype = jnp.bfloat16 if x_nchw.dtype == jnp.bfloat16 else jnp.float32
    w_taps = jnp.transpose(conv_w_oihw, (2, 3, 0, 1)).reshape(9, Cout, Cin).astype(mm_dtype)

    # Per-tap validity masks: built with numpy (baked constants), resident in VMEM.
    ys, xs = np.meshgrid(np.arange(H), np.arange(W), indexing="ij")
    rows = []
    for kh in range(3):
        for kw in range(3):
            valid = ((ys + kh - 1 >= 0) & (ys + kh - 1 < H)
                     & (xs + kw - 1 >= 0) & (xs + kw - 1 < W))
            rows.append(valid.reshape(HW))
    masks = jnp.asarray(np.stack(rows).astype(np.float32))               # (9, HW)

    # Batch tile: amortize per-grid-step overhead, keep >= 2 "parallel" blocks for the
    # 2 TensorCores on v7x (neutral on single-TC v5e/v6e).
    if b_tile is None:
        b_tile = max((d for d in range(1, N // 2 + 1) if N % d == 0), default=1)
    assert N % b_tile == 0
    grid = (N // b_tile,)

    # VMEM budget from actual block sizes (double-buffered I/O + f32 intermediates),
    # clamped to v7x's 64 MiB physical VMEM.
    itemsize = jnp.dtype(x_nchw.dtype).itemsize
    blk_io = b_tile * (Cin + Cout) * HW * itemsize
    live_f32 = 6 * b_tile * max(Cin, Cout) * HW * 4
    resident = (9 * Cout * max(Cin, 128) + 16 * HW + 2 * 8 * 128) * 4
    vmem_limit = int(min(max(2 * blk_io + live_f32 + resident + (4 << 20), 16 << 20),
                         64 << 20))

    out_flat = pl.pallas_call(
        functools.partial(_feature_fusion_kernel, width=W),
        out_shape=jax.ShapeDtypeStruct((N, Cout, HW), x_nchw.dtype),
        grid_spec=pltpu.PrefetchScalarGridSpec(
            num_scalar_prefetch=0,
            grid=grid,
            in_specs=[
                pl.BlockSpec((b_tile, Cin, HW), lambda n: (n, 0, 0)),
                pl.BlockSpec((9, Cout, Cin), lambda n: (0, 0, 0)),   # weight resident
                pl.BlockSpec((Cin, 1), lambda n: (0, 0)),            # BN scale resident
                pl.BlockSpec((Cin, 1), lambda n: (0, 0)),            # BN shift resident
                pl.BlockSpec((9, HW), lambda n: (0, 0)),             # tap masks resident
            ],
            out_specs=pl.BlockSpec((b_tile, Cout, HW), lambda n: (n, 0, 0)),
        ),
        compiler_params=pltpu.CompilerParams(
            dimension_semantics=("parallel",),
            vmem_limit_bytes=vmem_limit),
    )(x_flat, w_taps, scale.reshape(Cin, 1), shift.reshape(Cin, 1), masks)

    # Already NCHW: free contiguous reshape, no transpose.
    return out_flat.reshape(N, Cout, H, W)


def _reference(x_nchw, conv_w_oihw, bn_gamma, bn_beta, eps=1e-5):
    """Pure-JAX reference (same math) for correctness checking."""
    xf = x_nchw.astype(jnp.float32)
    mean = jnp.mean(xf, axis=(0, 2, 3), keepdims=True)
    var = jnp.mean(jnp.square(xf - mean), axis=(0, 2, 3), keepdims=True)
    act = jnp.maximum(
        (xf - mean) / jnp.sqrt(var + eps) * bn_gamma[None, :, None, None]
        + bn_beta[None, :, None, None], 0.0)
    out = jax.lax.conv_general_dilated(
        act.astype(x_nchw.dtype), conv_w_oihw.astype(x_nchw.dtype),
        window_strides=(1, 1), padding=((1, 1), (1, 1)),
        dimension_numbers=("NCHW", "OIHW", "NCHW"))
    return out


if __name__ == "__main__":
    # Small deterministic problem: N=2, in_ch=4, out_ch=8, 16x16 spatial.
    N, in_ch, out_ch, H, W = 2, 4, 8, 16, 16

    key = jax.random.PRNGKey(0)
    kx, kw = jax.random.split(key)

    x = jax.random.normal(kx, (N, in_ch, H, W), dtype=jnp.float32)

    # Conv2d weight, kaiming_normal_ (fan_in = in_ch*3*3, gain = sqrt(2)), OIHW layout.
    fan_in = in_ch * 3 * 3
    std = (2.0 / fan_in) ** 0.5
    conv_w = jax.random.normal(kw, (out_ch, in_ch, 3, 3), dtype=jnp.float32) * std

    # BatchNorm2d params: weight=1, bias=0 (per module init).
    gamma = jnp.ones((in_ch,), dtype=jnp.float32)
    beta = jnp.zeros((in_ch,), dtype=jnp.float32)

    out = jax.block_until_ready(feature_fusion(x, conv_w, gamma, beta))

    ref = _reference(x, conv_w, gamma, beta)
    assert out.shape == (N, out_ch, H, W), out.shape
    assert jnp.allclose(out, ref, atol=1e-4, rtol=1e-4), \
        float(jnp.max(jnp.abs(out - ref)))

    print("KERNEL_OK")
</pallas_src>

<mosaic_0001>
module attributes {stable_mosaic.version = 11 : i64} {
  func.func @_feature_fusion_kernel(%arg0: i32, %arg1: memref<1x4x256xf32, #tpu.memory_space<vmem>>, %arg2: memref<9x8x4xf32, #tpu.memory_space<vmem>>, %arg3: memref<4x1xf32, #tpu.memory_space<vmem>>, %arg4: memref<4x1xf32, #tpu.memory_space<vmem>>, %arg5: memref<9x256xf32, #tpu.memory_space<vmem>>, %arg6: memref<1x8x256xf32, #tpu.memory_space<vmem>>) attributes {dimension_semantics = [#tpu.dimension_semantics<parallel>], iteration_bounds = array<i64: 2>, scalar_prefetch = 0 : i64, scratch_operands = 0 : i64, tpu.core_type = #tpu.core_type<tc>, window_params = [{transform_indices = @transform_0, window_bounds = array<i64: 1, 4, 256>}, {pipeline_mode = #tpu.pipeline_mode<synchronous>, transform_indices = @transform_1, window_bounds = array<i64: 9, 8, 4>}, {pipeline_mode = #tpu.pipeline_mode<synchronous>, transform_indices = @transform_2, window_bounds = array<i64: 4, 1>}, {pipeline_mode = #tpu.pipeline_mode<synchronous>, transform_indices = @transform_3, window_bounds = array<i64: 4, 1>}, {pipeline_mode = #tpu.pipeline_mode<synchronous>, transform_indices = @transform_4, window_bounds = array<i64: 9, 256>}, {transform_indices = @transform_5, window_bounds = array<i64: 1, 8, 256>}]} {
    %c0 = arith.constant 0 : index
    %c0_0 = arith.constant 0 : index
    %c0_1 = arith.constant 0 : index
    %0 = vector.load %arg1[%c0, %c0_0, %c0_1] : memref<1x4x256xf32, #tpu.memory_space<vmem>>, vector<1x4x256xf32>
    %c0_2 = arith.constant 0 : index
    %c0_3 = arith.constant 0 : index
    %1 = vector.load %arg3[%c0_2, %c0_3] : memref<4x1xf32, #tpu.memory_space<vmem>>, vector<4x1xf32>
    %2 = vector.shape_cast %1 : vector<4x1xf32> to vector<1x4x1xf32>
    %3 = vector.broadcast %2 : vector<1x4x1xf32> to vector<1x4x256xf32>
    %4 = arith.mulf %0, %3 : vector<1x4x256xf32>
    %c0_4 = arith.constant 0 : index
    %c0_5 = arith.constant 0 : index
    %5 = vector.load %arg4[%c0_4, %c0_5] : memref<4x1xf32, #tpu.memory_space<vmem>>, vector<4x1xf32>
    %6 = vector.shape_cast %5 : vector<4x1xf32> to vector<1x4x1xf32>
    %7 = vector.broadcast %6 : vector<1x4x1xf32> to vector<1x4x256xf32>
    %8 = arith.addf %4, %7 : vector<1x4x256xf32>
    %cst = arith.constant 0.000000e+00 : f32
    %9 = vector.broadcast %cst : f32 to vector<1x4x256xf32>
    %10 = arith.maximumf %8, %9 : vector<1x4x256xf32>
    %cst_6 = arith.constant 0.000000e+00 : f32
    %11 = vector.broadcast %cst_6 : f32 to vector<8x256xf32>
    %c17_i32 = arith.constant 17 : i32
    %12 = tpu.dynamic_rotate %10 by %c17_i32 dim 2 : vector<1x4x256xf32>, i32 -> vector<1x4x256xf32>
    %c0_7 = arith.constant 0 : index
    %c0_8 = arith.constant 0 : index
    %13 = vector.load %arg5[%c0_7, %c0_8] : memref<9x256xf32, #tpu.memory_space<vmem>>, vector<1x256xf32>
    %14 = vector.shape_cast %13 : vector<1x256xf32> to vector<1x1x256xf32>
    %15 = vector.broadcast %14 : vector<1x1x256xf32> to vector<1x4x256xf32>
    %16 = arith.mulf %12, %15 : vector<1x4x256xf32>
    %c0_9 = arith.constant 0 : index
    %c0_10 = arith.constant 0 : index
    %c0_11 = arith.constant 0 : index
    %17 = vector.load %arg2[%c0_9, %c0_10, %c0_11] : memref<9x8x4xf32, #tpu.memory_space<vmem>>, vector<1x8x4xf32>
    %18 = vector.shape_cast %17 : vector<1x8x4xf32> to vector<8x4xf32>
    %19 = vector.shape_cast %16 : vector<1x4x256xf32> to vector<4x256xf32>
    %cst_12 = arith.constant dense<0.000000e+00> : vector<8x256xf32>
    %20 = tpu.matmul %18, %19, %cst_12 {dimension_numbers = #tpu.dot_dimension_numbers<[1], [0], [0], [1], [0, 0, 1, 1], [], []>} : vector<8x4xf32>, vector<4x256xf32>, vector<8x256xf32> -> vector<8x256xf32>
    %21 = arith.addf %11, %20 : vector<8x256xf32>
    %c16_i32 = arith.constant 16 : i32
    %22 = tpu.dynamic_rotate %10 by %c16_i32 dim 2 : vector<1x4x256xf32>, i32 -> vector<1x4x256xf32>
    %c1 = arith.constant 1 : index
    %c0_13 = arith.constant 0 : index
    %23 = vector.load %arg5[%c1, %c0_13] : memref<9x256xf32, #tpu.memory_space<vmem>>, vector<1x256xf32>
    %24 = vector.shape_cast %23 : vector<1x256xf32> to vector<1x1x256xf32>
    %25 = vector.broadcast %24 : vector<1x1x256xf32> to vector<1x4x256xf32>
    %26 = arith.mulf %22, %25 : vector<1x4x256xf32>
    %c1_14 = arith.constant 1 : index
    %c0_15 = arith.constant 0 : index
    %c0_16 = arith.constant 0 : index
    %27 = vector.load %arg2[%c1_14, %c0_15, %c0_16] : memref<9x8x4xf32, #tpu.memory_space<vmem>>, vector<1x8x4xf32>
    %28 = vector.shape_cast %27 : vector<1x8x4xf32> to vector<8x4xf32>
    %29 = vector.shape_cast %26 : vector<1x4x256xf32> to vector<4x256xf32>
    %cst_17 = arith.constant dense<0.000000e+00> : vector<8x256xf32>
    %30 = tpu.matmul %28, %29, %cst_17 {dimension_numbers = #tpu.dot_dimension_numbers<[1], [0], [0], [1], [0, 0, 1, 1], [], []>} : vector<8x4xf32>, vector<4x256xf32>, vector<8x256xf32> -> vector<8x256xf32>
    %31 = arith.addf %21, %30 : vector<8x256xf32>
    %c15_i32 = arith.constant 15 : i32
    %32 = tpu.dynamic_rotate %10 by %c15_i32 dim 2 : vector<1x4x256xf32>, i32 -> vector<1x4x256xf32>
    %c2 = arith.constant 2 : index
    %c0_18 = arith.constant 0 : index
    %33 = vector.load %arg5[%c2, %c0_18] : memref<9x256xf32, #tpu.memory_space<vmem>>, vector<1x256xf32>
    %34 = vector.shape_cast %33 : vector<1x256xf32> to vector<1x1x256xf32>
    %35 = vector.broadcast %34 : vector<1x1x256xf32> to vector<1x4x256xf32>
    %36 = arith.mulf %32, %35 : vector<1x4x256xf32>
    %c2_19 = arith.constant 2 : index
    %c0_20 = arith.constant 0 : index
    %c0_21 = arith.constant 0 : index
    %37 = vector.load %arg2[%c2_19, %c0_20, %c0_21] : memref<9x8x4xf32, #tpu.memory_space<vmem>>, vector<1x8x4xf32>
    %38 = vector.shape_cast %37 : vector<1x8x4xf32> to vector<8x4xf32>
    %39 = vector.shape_cast %36 : vector<1x4x256xf32> to vector<4x256xf32>
    %cst_22 = arith.constant dense<0.000000e+00> : vector<8x256xf32>
    %40 = tpu.matmul %38, %39, %cst_22 {dimension_numbers = #tpu.dot_dimension_numbers<[1], [0], [0], [1], [0, 0, 1, 1], [], []>} : vector<8x4xf32>, vector<4x256xf32>, vector<8x256xf32> -> vector<8x256xf32>
    %41 = arith.addf %31, %40 : vector<8x256xf32>
    %c1_i32 = arith.constant 1 : i32
    %42 = tpu.dynamic_rotate %10 by %c1_i32 dim 2 : vector<1x4x256xf32>, i32 -> vector<1x4x256xf32>
    %c3 = arith.constant 3 : index
    %c0_23 = arith.constant 0 : index
    %43 = vector.load %arg5[%c3, %c0_23] : memref<9x256xf32, #tpu.memory_space<vmem>>, vector<1x256xf32>
    %44 = vector.shape_cast %43 : vector<1x256xf32> to vector<1x1x256xf32>
    %45 = vector.broadcast %44 : vector<1x1x256xf32> to vector<1x4x256xf32>
    %46 = arith.mulf %42, %45 : vector<1x4x256xf32>
    %c3_24 = arith.constant 3 : index
    %c0_25 = arith.constant 0 : index
    %c0_26 = arith.constant 0 : index
    %47 = vector.load %arg2[%c3_24, %c0_25, %c0_26] : memref<9x8x4xf32, #tpu.memory_space<vmem>>, vector<1x8x4xf32>
    %48 = vector.shape_cast %47 : vector<1x8x4xf32> to vector<8x4xf32>
    %49 = vector.shape_cast %46 : vector<1x4x256xf32> to vector<4x256xf32>
    %cst_27 = arith.constant dense<0.000000e+00> : vector<8x256xf32>
    %50 = tpu.matmul %48, %49, %cst_27 {dimension_numbers = #tpu.dot_dimension_numbers<[1], [0], [0], [1], [0, 0, 1, 1], [], []>} : vector<8x4xf32>, vector<4x256xf32>, vector<8x256xf32> -> vector<8x256xf32>
    %51 = arith.addf %41, %50 : vector<8x256xf32>
    %c4 = arith.constant 4 : index
    %c0_28 = arith.constant 0 : index
    %c0_29 = arith.constant 0 : index
    %52 = vector.load %arg2[%c4, %c0_28, %c0_29] : memref<9x8x4xf32, #tpu.memory_space<vmem>>, vector<1x8x4xf32>
    %53 = vector.shape_cast %52 : vector<1x8x4xf32> to vector<8x4xf32>
    %54 = vector.shape_cast %10 : vector<1x4x256xf32> to vector<4x256xf32>
    %cst_30 = arith.constant dense<0.000000e+00> : vector<8x256xf32>
    %55 = tpu.matmul %53, %54, %cst_30 {dimension_numbers = #tpu.dot_dimension_numbers<[1], [0], [0], [1], [0, 0, 1, 1], [], []>} : vector<8x4xf32>, vector<4x256xf32>, vector<8x256xf32> -> vector<8x256xf32>
    %56 = arith.addf %51, %55 : vector<8x256xf32>
    %c255_i32 = arith.constant 255 : i32
    %57 = tpu.dynamic_rotate %10 by %c255_i32 dim 2 : vector<1x4x256xf32>, i32 -> vector<1x4x256xf32>
    %c5 = arith.constant 5 : index
    %c0_31 = arith.constant 0 : index
    %58 = vector.load %arg5[%c5, %c0_31] : memref<9x256xf32, #tpu.memory_space<vmem>>, vector<1x256xf32>
    %59 = vector.shape_cast %58 : vector<1x256xf32> to vector<1x1x256xf32>
    %60 = vector.broadcast %59 : vector<1x1x256xf32> to vector<1x4x256xf32>
    %61 = arith.mulf %57, %60 : vector<1x4x256xf32>
    %c5_32 = arith.constant 5 : index
    %c0_33 = arith.constant 0 : index
    %c0_34 = arith.constant 0 : index
    %62 = vector.load %arg2[%c5_32, %c0_33, %c0_34] : memref<9x8x4xf32, #tpu.memory_space<vmem>>, vector<1x8x4xf32>
    %63 = vector.shape_cast %62 : vector<1x8x4xf32> to vector<8x4xf32>
    %64 = vector.shape_cast %61 : vector<1x4x256xf32> to vector<4x256xf32>
    %cst_35 = arith.constant dense<0.000000e+00> : vector<8x256xf32>
    %65 = tpu.matmul %63, %64, %cst_35 {dimension_numbers = #tpu.dot_dimension_numbers<[1], [0], [0], [1], [0, 0, 1, 1], [], []>} : vector<8x4xf32>, vector<4x256xf32>, vector<8x256xf32> -> vector<8x256xf32>
    %66 = arith.addf %56, %65 : vector<8x256xf32>
    %c241_i32 = arith.constant 241 : i32
    %67 = tpu.dynamic_rotate %10 by %c241_i32 dim 2 : vector<1x4x256xf32>, i32 -> vector<1x4x256xf32>
    %c6 = arith.constant 6 : index
    %c0_36 = arith.constant 0 : index
    %68 = vector.load %arg5[%c6, %c0_36] : memref<9x256xf32, #tpu.memory_space<vmem>>, vector<1x256xf32>
    %69 = vector.shape_cast %68 : vector<1x256xf32> to vector<1x1x256xf32>
    %70 = vector.broadcast %69 : vector<1x1x256xf32> to vector<1x4x256xf32>
    %71 = arith.mulf %67, %70 : vector<1x4x256xf32>
    %c6_37 = arith.constant 6 : index
    %c0_38 = arith.constant 0 : index
    %c0_39 = arith.constant 0 : index
    %72 = vector.load %arg2[%c6_37, %c0_38, %c0_39] : memref<9x8x4xf32, #tpu.memory_space<vmem>>, vector<1x8x4xf32>
    %73 = vector.shape_cast %72 : vector<1x8x4xf32> to vector<8x4xf32>
    %74 = vector.shape_cast %71 : vector<1x4x256xf32> to vector<4x256xf32>
    %cst_40 = arith.constant dense<0.000000e+00> : vector<8x256xf32>
    %75 = tpu.matmul %73, %74, %cst_40 {dimension_numbers = #tpu.dot_dimension_numbers<[1], [0], [0], [1], [0, 0, 1, 1], [], []>} : vector<8x4xf32>, vector<4x256xf32>, vector<8x256xf32> -> vector<8x256xf32>
    %76 = arith.addf %66, %75 : vector<8x256xf32>
    %c240_i32 = arith.constant 240 : i32
    %77 = tpu.dynamic_rotate %10 by %c240_i32 dim 2 : vector<1x4x256xf32>, i32 -> vector<1x4x256xf32>
    %c7 = arith.constant 7 : index
    %c0_41 = arith.constant 0 : index
    %78 = vector.load %arg5[%c7, %c0_41] : memref<9x256xf32, #tpu.memory_space<vmem>>, vector<1x256xf32>
    %79 = vector.shape_cast %78 : vector<1x256xf32> to vector<1x1x256xf32>
    %80 = vector.broadcast %79 : vector<1x1x256xf32> to vector<1x4x256xf32>
    %81 = arith.mulf %77, %80 : vector<1x4x256xf32>
    %c7_42 = arith.constant 7 : index
    %c0_43 = arith.constant 0 : index
    %c0_44 = arith.constant 0 : index
    %82 = vector.load %arg2[%c7_42, %c0_43, %c0_44] : memref<9x8x4xf32, #tpu.memory_space<vmem>>, vector<1x8x4xf32>
    %83 = vector.shape_cast %82 : vector<1x8x4xf32> to vector<8x4xf32>
    %84 = vector.shape_cast %81 : vector<1x4x256xf32> to vector<4x256xf32>
    %cst_45 = arith.constant dense<0.000000e+00> : vector<8x256xf32>
    %85 = tpu.matmul %83, %84, %cst_45 {dimension_numbers = #tpu.dot_dimension_numbers<[1], [0], [0], [1], [0, 0, 1, 1], [], []>} : vector<8x4xf32>, vector<4x256xf32>, vector<8x256xf32> -> vector<8x256xf32>
    %86 = arith.addf %76, %85 : vector<8x256xf32>
    %c239_i32 = arith.constant 239 : i32
    %87 = tpu.dynamic_rotate %10 by %c239_i32 dim 2 : vector<1x4x256xf32>, i32 -> vector<1x4x256xf32>
    %c8 = arith.constant 8 : index
    %c0_46 = arith.constant 0 : index
    %88 = vector.load %arg5[%c8, %c0_46] : memref<9x256xf32, #tpu.memory_space<vmem>>, vector<1x256xf32>
    %89 = vector.shape_cast %88 : vector<1x256xf32> to vector<1x1x256xf32>
    %90 = vector.broadcast %89 : vector<1x1x256xf32> to vector<1x4x256xf32>
    %91 = arith.mulf %87, %90 : vector<1x4x256xf32>
    %c8_47 = arith.constant 8 : index
    %c0_48 = arith.constant 0 : index
    %c0_49 = arith.constant 0 : index
    %92 = vector.load %arg2[%c8_47, %c0_48, %c0_49] : memref<9x8x4xf32, #tpu.memory_space<vmem>>, vector<1x8x4xf32>
    %93 = vector.shape_cast %92 : vector<1x8x4xf32> to vector<8x4xf32>
    %94 = vector.shape_cast %91 : vector<1x4x256xf32> to vector<4x256xf32>
    %cst_50 = arith.constant dense<0.000000e+00> : vector<8x256xf32>
    %95 = tpu.matmul %93, %94, %cst_50 {dimension_numbers = #tpu.dot_dimension_numbers<[1], [0], [0], [1], [0, 0, 1, 1], [], []>} : vector<8x4xf32>, vector<4x256xf32>, vector<8x256xf32> -> vector<8x256xf32>
    %96 = arith.addf %86, %95 : vector<8x256xf32>
    %c0_51 = arith.constant 0 : index
    %c0_52 = arith.constant 0 : index
    %c0_53 = arith.constant 0 : index
    %97 = vector.load %arg6[%c0_51, %c0_52, %c0_53] : memref<1x8x256xf32, #tpu.memory_space<vmem>>, vector<1x8x256xf32>
    %98 = vector.shape_cast %97 : vector<1x8x256xf32> to vector<8x256xf32>
    %99 = vector.shape_cast %96 : vector<8x256xf32> to vector<1x8x256xf32>
    tpu.vector_store %arg6[%c0_51, %c0_52, %c0_53], %99 {strides = array<i32>} : memref<1x8x256xf32, #tpu.memory_space<vmem>>, vector<1x8x256xf32>,
    return
  }
  func.func @transform_0(%arg0: i32) -> (i32, i32, i32) {
    %c0_i32 = arith.constant 0 : i32
    %c0_i32_0 = arith.constant 0 : i32
    %c0_i32_1 = arith.constant 0 : i32
    return %arg0, %c0_i32, %c0_i32_0 : i32, i32, i32
  }
  func.func @transform_1(%arg0: i32) -> (i32, i32, i32) {
    %c0_i32 = arith.constant 0 : i32
    %c0_i32_0 = arith.constant 0 : i32
    %c0_i32_1 = arith.constant 0 : i32
    %c0_i32_2 = arith.constant 0 : i32
    return %c0_i32, %c0_i32_0, %c0_i32_1 : i32, i32, i32
  }
  func.func @transform_2(%arg0: i32) -> (i32, i32) {
    %c0_i32 = arith.constant 0 : i32
    %c0_i32_0 = arith.constant 0 : i32
    %c0_i32_1 = arith.constant 0 : i32
    return %c0_i32, %c0_i32_0 : i32, i32
  }
  func.func @transform_3(%arg0: i32) -> (i32, i32) {
    %c0_i32 = arith.constant 0 : i32
    %c0_i32_0 = arith.constant 0 : i32
    %c0_i32_1 = arith.constant 0 : i32
    return %c0_i32, %c0_i32_0 : i32, i32
  }
  func.func @transform_4(%arg0: i32) -> (i32, i32) {
    %c0_i32 = arith.constant 0 : i32
    %c0_i32_0 = arith.constant 0 : i32
    %c0_i32_1 = arith.constant 0 : i32
    return %c0_i32, %c0_i32_0 : i32, i32
  }
  func.func @transform_5(%arg0: i32) -> (i32, i32, i32) {
    %c0_i32 = arith.constant 0 : i32
    %c0_i32_0 = arith.constant 0 : i32
    %c0_i32_1 = arith.constant 0 : i32
    return %arg0, %c0_i32, %c0_i32_0 : i32, i32, i32
  }
}

</mosaic_0001>

<llo_original>
// kernel: tpu_custom_call.1
$region0: #{tpu_custom_call.1}
  #allocation0 [shape = 'u32[]', space=smem, size = 0x4, offset = 0x4, fixed_abs, tag = 'smem constant byte address 0x4 - core index']
  #allocation1 [shape = 'u32[144,128]{1,0:T(1,128)}', space=vmem, size = 0x12000, scoped, tag = 'internal scratch']
  %s0 = inlined_call_operand.vmem [shape: f32[2,4,256], index: 0, kind: input, shape index: {}]
  %s1 = inlined_call_operand.vmem [shape: f32[9,8,4], index: 1, kind: input, shape index: {}]
  %s2 = inlined_call_operand.vmem [shape: f32[4,1], index: 2, kind: input, shape index: {}]
  %s3 = inlined_call_operand.vmem [shape: f32[4,1], index: 3, kind: input, shape index: {}]
  %s4 = inlined_call_operand.vmem [shape: f32[9,256], index: 4, kind: input, shape index: {}]
  %s5 = inlined_call_operand.hbm [shape: f32[2,8,256], index: 5, kind: output, shape index: {}]
  %s6 = sld [smem:[#allocation0]]
  $region53: #{tpu_custom_call.1} parent=0
    _
  %s8 = ssub.s32 1, %s6
  %s9 = scalar_select 0, %s8, %s6
  $region1: #{tpu_custom_call.1} parent=0
    #allocation2 [shape = 'u8[16384]{0}', space=vmem, size = 0x4000, scoped, tag = 'output window, operand 0']
    #allocation3 [shape = 's32[2]{0}', space=sflag, size = 0x8, scoped, tag = 'scoped memory for tpu_custom_call.1']
    %10 = vsyncpa [#allocation3], 0
    %s11 = scalar_lea.sflag [#allocation3], 1
    %12 = vsyncpa %s11, 0
    loop: start=0, step=1, limit=4
    $region2: #{tpu_custom_call.1} parent=1 // loop_pre_header
      _
    $region3: #{tpu_custom_call.1} parent=1 // loop_header
      %s14 = sphi 0, %s18
      %p15 = scmp.ge.s32.totalorder %s14, 4
      %s24 = sphi 0, %s26
      %s27 = sphi 0, %s24
      %s28 = sphi 0, %s27
      %s44 = sphi 0, %s28
      %s48 = sphi 0, %s48
      %s50 = sphi 0, %s48
      %s51 = sphi 0, %s50
      %s65 = sphi 0, %s51
      %s69 = sphi 0, %s69
      %s71 = sphi 0, %s69
      %s72 = sphi 0, %s71
      %s86 = sphi 0, %s72
      %s90 = sphi 0, %s90
      %s92 = sphi 0, %s90
      %s93 = sphi 0, %s92
      %s107 = sphi 0, %s93
      %s111 = sphi 0, %s111
      %s113 = sphi 0, %s111
      %s114 = sphi 0, %s113
      %s128 = sphi 0, %s114
      %s134 = sphi 0, %s136
      %s137 = sphi 0, %s134
      %s138 = sphi 0, %s137
      %s154 = sphi 0, %s138
    $region4: #{tpu_custom_call.1} parent=1 // loop_header_branch
      %17 = sbr.rel (%p15) target = $region8
    $region5: #{tpu_custom_call.1} parent=1 // loop_body
      %s19 = ssub.s32 %s14, 1
      %s20 = ssub.s32 %s14, 2
      %s21 = sadd.s32 %s14, 1
      %s22 = ssub.s32 %s14, %s21
      %p23 = scmp.eq.s32.totalorder %s22, 0
      %s25 = sadd.s32 %s24, 1
      %s26 = scalar_select %p23, %s24, %s25
      %p29 = pneg %p23
      %p30 = scmp.eq.s32.totalorder %s14, 1
      %p31 = por %p29, %p30
      %p32 = scmp.ne.s32.totalorder %s24, %s27
      %p33 = scmp.eq.s32.totalorder %s14, 0
      %p34 = por %p32, %p33
      %p35 = scmp.ne.s32.totalorder %s24, %s27
      %p36 = scmp.eq.s32.totalorder %s19, 1
      %p37 = por %p35, %p36
      %p38 = scmp.ne.s32.totalorder %s27, %s28
      %p39 = scmp.eq.s32.totalorder %s19, 0
      %p40 = por %p38, %p39
      %p41 = scmp.ne.s32.totalorder %s27, %s28
      %p42 = scmp.eq.s32.totalorder %s20, 1
      %p43 = por %p41, %p42
      %p45 = scmp.ne.s32.totalorder %s28, %s44
      %p46 = scmp.eq.s32.totalorder %s20, 0
      %p47 = por %p45, %p46
      %s49 = sadd.s32 %s48, 1
      %p52 = scmp.eq.s32.totalorder %s14, 1
      %p53 = scmp.ne.s32.totalorder %s48, %s50
      %p54 = scmp.eq.s32.totalorder %s14, 0
      %p55 = por %p53, %p54
      %p56 = scmp.ne.s32.totalorder %s48, %s50
      %p57 = scmp.eq.s32.totalorder %s19, 1
      %p58 = por %p56, %p57
      %p59 = scmp.ne.s32.totalorder %s50, %s51
      %p60 = scmp.eq.s32.totalorder %s19, 0
      %p61 = por %p59, %p60
      %p62 = scmp.ne.s32.totalorder %s50, %s51
      %p63 = scmp.eq.s32.totalorder %s20, 1
      %p64 = por %p62, %p63
      %p66 = scmp.ne.s32.totalorder %s51, %s65
      %p67 = scmp.eq.s32.totalorder %s20, 0
      %p68 = por %p66, %p67
      %s70 = sadd.s32 %s69, 1
      %p73 = scmp.eq.s32.totalorder %s14, 1
      %p74 = scmp.ne.s32.totalorder %s69, %s71
      %p75 = scmp.eq.s32.totalorder %s14, 0
      %p76 = por %p74, %p75
      %p77 = scmp.ne.s32.totalorder %s69, %s71
      %p78 = scmp.eq.s32.totalorder %s19, 1
      %p79 = por %p77, %p78
      %p80 = scmp.ne.s32.totalorder %s71, %s72
      %p81 = scmp.eq.s32.totalorder %s19, 0
      %p82 = por %p80, %p81
      %p83 = scmp.ne.s32.totalorder %s71, %s72
      %p84 = scmp.eq.s32.totalorder %s20, 1
      %p85 = por %p83, %p84
      %p87 = scmp.ne.s32.totalorder %s72, %s86
      %p88 = scmp.eq.s32.totalorder %s20, 0
      %p89 = por %p87, %p88
      %s91 = sadd.s32 %s90, 1
      %p94 = scmp.eq.s32.totalorder %s14, 1
      %p95 = scmp.ne.s32.totalorder %s90, %s92
      %p96 = scmp.eq.s32.totalorder %s14, 0
      %p97 = por %p95, %p96
      %p98 = scmp.ne.s32.totalorder %s90, %s92
      %p99 = scmp.eq.s32.totalorder %s19, 1
      %p100 = por %p98, %p99
      %p101 = scmp.ne.s32.totalorder %s92, %s93
      %p102 = scmp.eq.s32.totalorder %s19, 0
      %p103 = por %p101, %p102
      %p104 = scmp.ne.s32.totalorder %s92, %s93
      %p105 = scmp.eq.s32.totalorder %s20, 1
      %p106 = por %p104, %p105
      %p108 = scmp.ne.s32.totalorder %s93, %s107
      %p109 = scmp.eq.s32.totalorder %s20, 0
      %p110 = por %p108, %p109
      %s112 = sadd.s32 %s111, 1
      %p115 = scmp.eq.s32.totalorder %s14, 1
      %p116 = scmp.ne.s32.totalorder %s111, %s113
      %p117 = scmp.eq.s32.totalorder %s14, 0
      %p118 = por %p116, %p117
      %p119 = scmp.ne.s32.totalorder %s111, %s113
      %p120 = scmp.eq.s32.totalorder %s19, 1
      %p121 = por %p119, %p120
      %p122 = scmp.ne.s32.totalorder %s113, %s114
      %p123 = scmp.eq.s32.totalorder %s19, 0
      %p124 = por %p122, %p123
      %p125 = scmp.ne.s32.totalorder %s113, %s114
      %p126 = scmp.eq.s32.totalorder %s20, 1
      %p127 = por %p125, %p126
      %p129 = scmp.ne.s32.totalorder %s114, %s128
      %p130 = scmp.eq.s32.totalorder %s20, 0
      %p131 = por %p129, %p130
      %s132 = ssub.s32 %s14, %s21
      %p133 = scmp.eq.s32.totalorder %s132, 0
      %s135 = sadd.s32 %s134, 1
      %s136 = scalar_select %p133, %s134, %s135
      %p139 = pneg %p133
      %p140 = scmp.eq.s32.totalorder %s14, 1
      %p141 = por %p139, %p140
      %p142 = scmp.ne.s32.totalorder %s134, %s137
      %p143 = scmp.eq.s32.totalorder %s14, 0
      %p144 = por %p142, %p143
      %p145 = scmp.ne.s32.totalorder %s134, %s137
      %p146 = scmp.eq.s32.totalorder %s19, 1
      %p147 = por %p145, %p146
      %p148 = scmp.ne.s32.totalorder %s137, %s138
      %p149 = scmp.eq.s32.totalorder %s19, 0
      %p150 = por %p148, %p149
      %p151 = scmp.ne.s32.totalorder %s137, %s138
      %p152 = scmp.eq.s32.totalorder %s20, 1
      %p153 = por %p151, %p152
      %p155 = scmp.ne.s32.totalorder %s138, %s154
      %p156 = scmp.eq.s32.totalorder %s20, 0
      %p157 = por %p155, %p156
      %p158 = scmp.le.s32.totalorder 1, %s14
      %p159 = scmp.lt.s32.totalorder %s14, 3
      %p160 = pnand %p158, %p159
      %p161 = pneg %p160
      // Predicated region
      $region9: #{tpu_custom_call.1} parent=5 // pred_check
        _
      $region10: #{tpu_custom_call.1} parent=5 // pred_check_branch
        %163 = sbr.rel (%p160) target = $region12
      $region11: #{tpu_custom_call.1} parent=5 // pred_region
        %s164 = ssub.s32 %s14, 1
        // Predicated region
        $region13: #{tpu_custom_call.1} parent=11 // pred_check
          %p165 = pneg %p61
        $region14: #{tpu_custom_call.1} parent=11 // pred_check_branch
          %167 = sbr.rel (%p165) target = $region16
        $region15: #{tpu_custom_call.1} parent=11 // pred_region
          _
        $region16: #{tpu_custom_call.1} parent=11 // pred_fallthru
          _
        // Predicated region
        $region17: #{tpu_custom_call.1} parent=11 // pred_check
          %p168 = pneg %p82
        $region18: #{tpu_custom_call.1} parent=11 // pred_check_branch
          %170 = sbr.rel (%p168) target = $region20
        $region19: #{tpu_custom_call.1} parent=11 // pred_region
          _
        $region20: #{tpu_custom_call.1} parent=11 // pred_fallthru
          _
        // Predicated region
        $region21: #{tpu_custom_call.1} parent=11 // pred_check
          %p171 = pneg %p103
        $region22: #{tpu_custom_call.1} parent=11 // pred_check_branch
          %173 = sbr.rel (%p171) target = $region24
        $region23: #{tpu_custom_call.1} parent=11 // pred_region
          _
        $region24: #{tpu_custom_call.1} parent=11 // pred_fallthru
          _
        // Predicated region
        $region25: #{tpu_custom_call.1} parent=11 // pred_check
          %p174 = pneg %p124
        $region26: #{tpu_custom_call.1} parent=11 // pred_check_branch
          %176 = sbr.rel (%p174) target = $region28
        $region27: #{tpu_custom_call.1} parent=11 // pred_region
          _
        $region28: #{tpu_custom_call.1} parent=11 // pred_fallthru
          _
      $region12: #{tpu_custom_call.1} parent=5 // pred_fallthru
        _
      %p177 = scmp.lt.s32.totalorder %s14, 2
      // Predicated region
      $region29: #{tpu_custom_call.1} parent=5 // pred_check
        %p178 = pneg %p177
      $region30: #{tpu_custom_call.1} parent=5 // pred_check_branch
        %180 = sbr.rel (%p178) target = $region32
      $region31: #{tpu_custom_call.1} parent=5 // pred_region
        // Predicated region
        $region33: #{tpu_custom_call.1} parent=31 // pred_check
          %p181 = pneg %p34
        $region34: #{tpu_custom_call.1} parent=31 // pred_check_branch
          %183 = sbr.rel (%p181) target = $region36
        $region35: #{tpu_custom_call.1} parent=31 // pred_region
          %p184 = scmp.lt.s32.totalorder %s14, 1
          %s185 = scalar_select %p184, %s14, 1
          %s186 = smul.addr %s185, 2
          %s187 = smul.addr %s186, 4
          %s188 = scalar_lea.vmem %s0, %s187
        $region36: #{tpu_custom_call.1} parent=31 // pred_fallthru
          _
      $region32: #{tpu_custom_call.1} parent=5 // pred_fallthru
        _
      %p189 = scmp.le.s32.totalorder 1, %s14
      %p190 = scmp.lt.s32.totalorder %s14, 3
      %p191 = pnand %p189, %p190
      %p192 = pneg %p191
      // Predicated region
      $region37: #{tpu_custom_call.1} parent=5 // pred_check
        _
      $region38: #{tpu_custom_call.1} parent=5 // pred_check_branch
        %194 = sbr.rel (%p191) target = $region40
      $region39: #{tpu_custom_call.1} parent=5 // pred_region
        %s195 = ssub.s32 %s14, 1
        %p196 = scmp.lt.s32.totalorder %s19, 1
        %s197 = scalar_select %p196, %s19, 1
        %s198 = smul.addr %s197, 2
        %s199 = smul.addr %s198, 4
        %s200 = scalar_lea.vmem %s0, %s199
        %p201 = pneg %p40
        %p202 = pneg %p37
        %p203 = pneg %p61
        %p204 = pneg %p58
        %p205 = pneg %p82
        %p206 = pneg %p79
        %p207 = pneg %p103
        %p208 = pneg %p100
        %p209 = pneg %p124
        %p210 = pneg %p121
        %p211 = pneg %p150
        %p212 = pneg %p147
        %s213 = sand.u32 %s137, 1
        %s214 = scalar_lea.sflag [#allocation3], %s213
        %s215 = sand.u32 %s137, 1
        %s216 = smul.addr %s215, 16
        %s217 = scalar_lea.vmem [#allocation2], %s216
        %p218 = scmp.lt.s32.totalorder %s19, 1
        %s219 = scalar_select %p218, %s19, 1
        %s220 = smul.addr %s219, 2
        %s221 = smul.addr %s220, 4
        %s222 = scalar_lea.vmem %s0, %s221
        %v223 = vld [vmem:[%s222] sm:$0xff]
        %v224 = vld [vmem:[%s2] sm:$0xf]
        %226 = vset.pattern.permute.xlu0 0
        %227 = vperm.xlu0 %226, %v224
        %v228 = vpop.permute.xlu0 %227
        %v230 = vunpack.c.l.s4 839922192
        %v231 = vunpack.c.0.s8 %v230
        %v232 = vlaneseq
        %v233 = vshrl.u32 %v232, 7
        %v234 = vsub.s32 %v231, %v233
        %v235 = vrot.slane %v228, %v234
        %v237 = vmul.f32 %v223, %v235
        %v238 = vld [vmem:[%s3] sm:$0xf]
        %240 = vset.pattern.permute.xlu0 0
        %241 = vperm.xlu0 %240, %v238
        %v242 = vpop.permute.xlu0 %241
        %v244 = vunpack.c.l.s4 839922192
        %v245 = vunpack.c.0.s8 %v244
        %v246 = vlaneseq
        %v247 = vshrl.u32 %v246, 7
        %v248 = vsub.s32 %v245, %v247
        %v249 = vrot.slane %v242, %v248
        %v251 = vadd.f32 %v237, %v249
        %v252 = vmax.f32 %v251, 0.0
        %v254 = vcombine.high %v252, %v252
        %256 = vrot.lane.b32.xlu0 %v252, 17
        %v257 = vpop.permute.xlu0 %256
        %258 = vrot.lane.b32.xlu0 %v254, 17
        %v259 = vpop.permute.xlu0 %258
        %v260 = vlaneseq
        %v261 = vand.u32 %v260, 127
        %vm262 = vcmp.lt.s32.totalorder %v261, 17
        %v263 = vsel %vm262, %v257, %v259
        %v264 = vsel %vm262, %v259, %v257
        %v265 = vld [vmem:[%s4] ss:$8 sm:$0x3]
        %v267 = vlaneseq
        %v268 = vshrl.u32 %v267, 7
        %v269 = vsub.s32 0, %v268
        %v270 = vrot.slane %v265, %v269
        %v271 = vlaneseq
        %v272 = vshrl.u32 %v271, 7
        %v273 = vsub.s32 1, %v272
        %v274 = vrot.slane %v265, %v273
        %v277 = vmul.f32 %v264, %v270
        %v278 = vmul.f32 %v263, %v274
        %v279 = vld [vmem:[%s1] sm:$0xff]
        %280 = vrot.lane.b32.xlu0 %v252, 16
        %v281 = vpop.permute.xlu0 %280
        %282 = vrot.lane.b32.xlu0 %v254, 16
        %v283 = vpop.permute.xlu0 %282
        %vm284 = vcmp.lt.s32.totalorder %v261, 16
        %v285 = vsel %vm284, %v281, %v283
        %v286 = vsel %vm284, %v283, %v281
        %s287 = scalar_lea.vmem %s4, 1
        %v288 = vld [vmem:[%s287] ss:$8 sm:$0x3]
        %v290 = vlaneseq
        %v291 = vshrl.u32 %v290, 7
        %v292 = vsub.s32 0, %v291
        %v293 = vrot.slane %v288, %v292
        %v294 = vlaneseq
        %v295 = vshrl.u32 %v294, 7
        %v296 = vsub.s32 1, %v295
        %v297 = vrot.slane %v288, %v296
        %v300 = vmul.f32 %v286, %v293
        %v301 = vmul.f32 %v285, %v297
        %s302 = scalar_lea.vmem %s1, 8
        %v303 = vld [vmem:[%s302] sm:$0xff]
        %vm304 = vcmask 31744
        %v306 = vsel %vm304, %v303, 0
        %vm308 = vcmask 1043456
        %v310 = vsel %vm308, %v300, 0
        %v313 = vsel %vm308, %v301, 0
        %315 = vmatprep.subr.mxu0 %v313
        %316 = vmatpush1.msra.mxu0 %v310
        %317 = vmatprep.subr.mxu0 0.0
        %318 = vmatpush1.msra.mxu0 0.0
        %319 = vmatprep.subr.mxu0 0.0
        %320 = vmatpush1.msra.mxu0 0.0
        %321 = vmatprep.subr.mxu0 0.0
        %322 = vmatpush1.msra.mxu0 0.0
        %323 = vmatprep.subr.mxu0 0.0
        %324 = vmatpush1.msra.mxu0 0.0
        %325 = vmatprep.subr.mxu0 0.0
        %326 = vmatpush1.msra.mxu0 0.0
        %327 = vmatprep.subr.mxu0 0.0
        %328 = vmatpush1.msra.mxu0 0.0
        %329 = vmatprep.subr.mxu0 0.0
        %330 = vmatpush1.msra.mxu0 0.0
        %331 = vmatprep.subr.mxu0 0.0
        %332 = vmatpush1.msra.mxu0 0.0
        %333 = vmatprep.subr.mxu0 0.0
        %334 = vmatpush1.msra.mxu0 0.0
        %335 = vmatprep.subr.mxu0 0.0
        %336 = vmatpush1.msra.mxu0 0.0
        %337 = vmatprep.subr.mxu0 0.0
        %338 = vmatpush1.msra.mxu0 0.0
        %339 = vmatprep.subr.mxu0 0.0
        %340 = vmatpush1.msra.mxu0 0.0
        %341 = vmatprep.subr.mxu0 0.0
        %342 = vmatpush1.msra.mxu0 0.0
        %343 = vmatprep.subr.mxu0 0.0
        %344 = vmatpush1.msra.mxu0 0.0
        %345 = vmatprep.subr.mxu0 0.0
        %346 = vmatpush1.msra.mxu0 0.0
        %347 = vmatprep.subr.mxu0 0.0
        %348 = vmatpush1.msra.mxu0 0.0
        %349 = vmatprep.subr.mxu0 0.0
        %350 = vmatpush1.msra.mxu0 0.0
        %351 = vmatprep.subr.mxu0 0.0
        %352 = vmatpush1.msra.mxu0 0.0
        %353 = vmatprep.subr.mxu0 0.0
        %354 = vmatpush1.msra.mxu0 0.0
        %355 = vmatprep.subr.mxu0 0.0
        %356 = vmatpush1.msra.mxu0 0.0
        %357 = vmatprep.subr.mxu0 0.0
        %358 = vmatpush1.msra.mxu0 0.0
        %359 = vmatprep.subr.mxu0 0.0
        %360 = vmatpush1.msra.mxu0 0.0
        %361 = vmatprep.subr.mxu0 0.0
        %362 = vmatpush1.msra.mxu0 0.0
        %363 = vmatprep.subr.mxu0 0.0
        %364 = vmatpush1.msra.mxu0 0.0
        %365 = vmatprep.subr.mxu0 0.0
        %366 = vmatpush1.msra.mxu0 0.0
        %367 = vmatprep.subr.mxu0 0.0
        %368 = vmatpush1.msra.mxu0 0.0
        %369 = vmatprep.subr.mxu0 0.0
        %370 = vmatpush1.msra.mxu0 0.0
        %371 = vmatprep.subr.mxu0 0.0
        %372 = vmatpush1.msra.mxu0 0.0
        %373 = vmatprep.subr.mxu0 0.0
        %374 = vmatpush1.msra.mxu0 0.0
        %375 = vmatprep.subr.mxu0 0.0
        %376 = vmatpush1.msra.mxu0 0.0
        %377 = vmatprep.subr.mxu0 0.0
        %378 = vmatpush1.msra.mxu0 0.0
        %379 = vmatprep.mubr.f32.mxu0 0.0
        %380 = vmatmul.mubr.f32.gmra.mrb[0].mxu0 %v306
        %v381 = vpop.f32.mrb[0].mxu0
        %v382 = vadd.f32 0.0, %v381
        %v383 = vpop.f32.mrb[0].mxu0
        %v384 = vadd.f32 0.0, %v383
        %385 = vdwg.mxu0
        %v387 = vsel %vm304, %v279, 0
        %v390 = vsel %vm308, %v277, 0
        %v393 = vsel %vm308, %v278, 0
        %395 = vmatprep.subr.mxu0 %v393
        %396 = vmatpush1.msra.mxu0 %v390
        %397 = vmatprep.subr.mxu0 0.0
        %398 = vmatpush1.msra.mxu0 0.0
        %399 = vmatprep.subr.mxu0 0.0
        %400 = vmatpush1.msra.mxu0 0.0
        %401 = vmatprep.subr.mxu0 0.0
        %402 = vmatpush1.msra.mxu0 0.0
        %403 = vmatprep.subr.mxu0 0.0
        %404 = vmatpush1.msra.mxu0 0.0
        %405 = vmatprep.subr.mxu0 0.0
        %406 = vmatpush1.msra.mxu0 0.0
        %407 = vmatprep.subr.mxu0 0.0
        %408 = vmatpush1.msra.mxu0 0.0
        %409 = vmatprep.subr.mxu0 0.0
        %410 = vmatpush1.msra.mxu0 0.0
        %411 = vmatprep.subr.mxu0 0.0
        %412 = vmatpush1.msra.mxu0 0.0
        %413 = vmatprep.subr.mxu0 0.0
        %414 = vmatpush1.msra.mxu0 0.0
        %415 = vmatprep.subr.mxu0 0.0
        %416 = vmatpush1.msra.mxu0 0.0
        %417 = vmatprep.subr.mxu0 0.0
        %418 = vmatpush1.msra.mxu0 0.0
        %419 = vmatprep.subr.mxu0 0.0
        %420 = vmatpush1.msra.mxu0 0.0
        %421 = vmatprep.subr.mxu0 0.0
        %422 = vmatpush1.msra.mxu0 0.0
        %423 = vmatprep.subr.mxu0 0.0
        %424 = vmatpush1.msra.mxu0 0.0
        %425 = vmatprep.subr.mxu0 0.0
        %426 = vmatpush1.msra.mxu0 0.0
        %427 = vmatprep.subr.mxu0 0.0
        %428 = vmatpush1.msra.mxu0 0.0
        %429 = vmatprep.subr.mxu0 0.0
        %430 = vmatpush1.msra.mxu0 0.0
        %431 = vmatprep.subr.mxu0 0.0
        %432 = vmatpush1.msra.mxu0 0.0
        %433 = vmatprep.subr.mxu0 0.0
        %434 = vmatpush1.msra.mxu0 0.0
        %435 = vmatprep.subr.mxu0 0.0
        %436 = vmatpush1.msra.mxu0 0.0
        %437 = vmatprep.subr.mxu0 0.0
        %438 = vmatpush1.msra.mxu0 0.0
        %439 = vmatprep.subr.mxu0 0.0
        %440 = vmatpush1.msra.mxu0 0.0
        %441 = vmatprep.subr.mxu0 0.0
        %442 = vmatpush1.msra.mxu0 0.0
        %443 = vmatprep.subr.mxu0 0.0
        %444 = vmatpush1.msra.mxu0 0.0
        %445 = vmatprep.subr.mxu0 0.0
        %446 = vmatpush1.msra.mxu0 0.0
        %447 = vmatprep.subr.mxu0 0.0
        %448 = vmatpush1.msra.mxu0 0.0
        %449 = vmatprep.subr.mxu0 0.0
        %450 = vmatpush1.msra.mxu0 0.0
        %451 = vmatprep.subr.mxu0 0.0
        %452 = vmatpush1.msra.mxu0 0.0
        %453 = vmatprep.subr.mxu0 0.0
        %454 = vmatpush1.msra.mxu0 0.0
        %455 = vmatprep.subr.mxu0 0.0
        %456 = vmatpush1.msra.mxu0 0.0
        %457 = vmatprep.subr.mxu0 0.0
        %458 = vmatpush1.msra.mxu0 0.0
        %459 = vmatprep.mubr.f32.mxu0 0.0
        %460 = vmatmul.mubr.f32.gmra.mrb[0].mxu0 %v387
        %v461 = vpop.f32.mrb[0].mxu0
        %v462 = vadd.f32 %v382, %v461
        %v463 = vpop.f32.mrb[0].mxu0
        %v464 = vadd.f32 %v384, %v463
        %465 = vdwg.mxu0
        %466 = vrot.lane.b32.xlu0 %v252, 15
        %v467 = vpop.permute.xlu0 %466
        %468 = vrot.lane.b32.xlu0 %v254, 15
        %v469 = vpop.permute.xlu0 %468
        %vm470 = vcmp.lt.s32.totalorder %v261, 15
        %v471 = vsel %vm470, %v467, %v469
        %v472 = vsel %vm470, %v469, %v467
        %s473 = scalar_lea.vmem %s4, 2
        %v474 = vld [vmem:[%s473] ss:$8 sm:$0x3]
        %v476 = vlaneseq
        %v477 = vshrl.u32 %v476, 7
        %v478 = vsub.s32 0, %v477
        %v479 = vrot.slane %v474, %v478
        %v480 = vlaneseq
        %v481 = vshrl.u32 %v480, 7
        %v482 = vsub.s32 1, %v481
        %v483 = vrot.slane %v474, %v482
        %v486 = vmul.f32 %v472, %v479
        %v487 = vmul.f32 %v471, %v483
        %s488 = scalar_lea.vmem %s1, 16
        %v489 = vld [vmem:[%s488] sm:$0xff]
        %v491 = vsel %vm304, %v489, 0
        %v494 = vsel %vm308, %v486, 0
        %v497 = vsel %vm308, %v487, 0
        %499 = vmatprep.subr.mxu0 %v497
        %500 = vmatpush1.msra.mxu0 %v494
        %501 = vmatprep.subr.mxu0 0.0
        %502 = vmatpush1.msra.mxu0 0.0
        %503 = vmatprep.subr.mxu0 0.0
        %504 = vmatpush1.msra.mxu0 0.0
        %505 = vmatprep.subr.mxu0 0.0
        %506 = vmatpush1.msra.mxu0 0.0
        %507 = vmatprep.subr.mxu0 0.0
        %508 = vmatpush1.msra.mxu0 0.0
        %509 = vmatprep.subr.mxu0 0.0
        %510 = vmatpush1.msra.mxu0 0.0
        %511 = vmatprep.subr.mxu0 0.0
        %512 = vmatpush1.msra.mxu0 0.0
        %513 = vmatprep.subr.mxu0 0.0
        %514 = vmatpush1.msra.mxu0 0.0
        %515 = vmatprep.subr.mxu0 0.0
        %516 = vmatpush1.msra.mxu0 0.0
        %517 = vmatprep.subr.mxu0 0.0
        %518 = vmatpush1.msra.mxu0 0.0
        %519 = vmatprep.subr.mxu0 0.0
        %520 = vmatpush1.msra.mxu0 0.0
        %521 = vmatprep.subr.mxu0 0.0
        %522 = vmatpush1.msra.mxu0 0.0
        %523 = vmatprep.subr.mxu0 0.0
        %524 = vmatpush1.msra.mxu0 0.0
        %525 = vmatprep.subr.mxu0 0.0
        %526 = vmatpush1.msra.mxu0 0.0
        %527 = vmatprep.subr.mxu0 0.0
        %528 = vmatpush1.msra.mxu0 0.0
        %529 = vmatprep.subr.mxu0 0.0
        %530 = vmatpush1.msra.mxu0 0.0
        %531 = vmatprep.subr.mxu0 0.0
        %532 = vmatpush1.msra.mxu0 0.0
        %533 = vmatprep.subr.mxu0 0.0
        %534 = vmatpush1.msra.mxu0 0.0
        %535 = vmatprep.subr.mxu0 0.0
        %536 = vmatpush1.msra.mxu0 0.0
        %537 = vmatprep.subr.mxu0 0.0
        %538 = vmatpush1.msra.mxu0 0.0
        %539 = vmatprep.subr.mxu0 0.0
        %540 = vmatpush1.msra.mxu0 0.0
        %541 = vmatprep.subr.mxu0 0.0
        %542 = vmatpush1.msra.mxu0 0.0
        %543 = vmatprep.subr.mxu0 0.0
        %544 = vmatpush1.msra.mxu0 0.0
        %545 = vmatprep.subr.mxu0 0.0
        %546 = vmatpush1.msra.mxu0 0.0
        %547 = vmatprep.subr.mxu0 0.0
        %548 = vmatpush1.msra.mxu0 0.0
        %549 = vmatprep.subr.mxu0 0.0
        %550 = vmatpush1.msra.mxu0 0.0
        %551 = vmatprep.subr.mxu0 0.0
        %552 = vmatpush1.msra.mxu0 0.0
        %553 = vmatprep.subr.mxu0 0.0
        %554 = vmatpush1.msra.mxu0 0.0
        %555 = vmatprep.subr.mxu0 0.0
        %556 = vmatpush1.msra.mxu0 0.0
        %557 = vmatprep.subr.mxu0 0.0
        %558 = vmatpush1.msra.mxu0 0.0
        %559 = vmatprep.subr.mxu0 0.0
        %560 = vmatpush1.msra.mxu0 0.0
        %561 = vmatprep.subr.mxu0 0.0
        %562 = vmatpush1.msra.mxu0 0.0
        %563 = vmatprep.mubr.f32.mxu0 0.0
        %564 = vmatmul.mubr.f32.gmra.mrb[0].mxu0 %v491
        %v565 = vpop.f32.mrb[0].mxu0
        %v566 = vadd.f32 0.0, %v565
        %v567 = vpop.f32.mrb[0].mxu0
        %v568 = vadd.f32 0.0, %v567
        %569 = vdwg.mxu0
        %v570 = vadd.f32 %v462, %v566
        %v571 = vadd.f32 %v464, %v568
        %572 = vrot.lane.b32.xlu0 %v252, 1
        %v573 = vpop.permute.xlu0 %572
        %574 = vrot.lane.b32.xlu0 %v254, 1
        %v575 = vpop.permute.xlu0 %574
        %vm576 = vcmp.lt.s32.totalorder %v261, 1
        %v577 = vsel %vm576, %v573, %v575
        %v578 = vsel %vm576, %v575, %v573
        %s579 = scalar_lea.vmem %s4, 3
        %v580 = vld [vmem:[%s579] ss:$8 sm:$0x3]
        %v582 = vlaneseq
        %v583 = vshrl.u32 %v582, 7
        %v584 = vsub.s32 0, %v583
        %v585 = vrot.slane %v580, %v584
        %v586 = vlaneseq
        %v587 = vshrl.u32 %v586, 7
        %v588 = vsub.s32 1, %v587
        %v589 = vrot.slane %v580, %v588
        %v592 = vmul.f32 %v578, %v585
        %v593 = vmul.f32 %v577, %v589
        %s594 = scalar_lea.vmem %s1, 24
        %v595 = vld [vmem:[%s594] sm:$0xff]
        %v597 = vsel %vm304, %v595, 0
        %v600 = vsel %vm308, %v592, 0
        %v603 = vsel %vm308, %v593, 0
        %605 = vmatprep.subr.mxu0 %v603
        %606 = vmatpush1.msra.mxu0 %v600
        %607 = vmatprep.subr.mxu0 0.0
        %608 = vmatpush1.msra.mxu0 0.0
        %609 = vmatprep.subr.mxu0 0.0
        %610 = vmatpush1.msra.mxu0 0.0
        %611 = vmatprep.subr.mxu0 0.0
        %612 = vmatpush1.msra.mxu0 0.0
        %613 = vmatprep.subr.mxu0 0.0
        %614 = vmatpush1.msra.mxu0 0.0
        %615 = vmatprep.subr.mxu0 0.0
        %616 = vmatpush1.msra.mxu0 0.0
        %617 = vmatprep.subr.mxu0 0.0
        %618 = vmatpush1.msra.mxu0 0.0
        %619 = vmatprep.subr.mxu0 0.0
        %620 = vmatpush1.msra.mxu0 0.0
        %621 = vmatprep.subr.mxu0 0.0
        %622 = vmatpush1.msra.mxu0 0.0
        %623 = vmatprep.subr.mxu0 0.0
        %624 = vmatpush1.msra.mxu0 0.0
        %625 = vmatprep.subr.mxu0 0.0
        %626 = vmatpush1.msra.mxu0 0.0
        %627 = vmatprep.subr.mxu0 0.0
        %628 = vmatpush1.msra.mxu0 0.0
        %629 = vmatprep.subr.mxu0 0.0
        %630 = vmatpush1.msra.mxu0 0.0
        %631 = vmatprep.subr.mxu0 0.0
        %632 = vmatpush1.msra.mxu0 0.0
        %633 = vmatprep.subr.mxu0 0.0
        %634 = vmatpush1.msra.mxu0 0.0
        %635 = vmatprep.subr.mxu0 0.0
        %636 = vmatpush1.msra.mxu0 0.0
        %637 = vmatprep.subr.mxu0 0.0
        %638 = vmatpush1.msra.mxu0 0.0
        %639 = vmatprep.subr.mxu0 0.0
        %640 = vmatpush1.msra.mxu0 0.0
        %641 = vmatprep.subr.mxu0 0.0
        %642 = vmatpush1.msra.mxu0 0.0
        %643 = vmatprep.subr.mxu0 0.0
        %644 = vmatpush1.msra.mxu0 0.0
        %645 = vmatprep.subr.mxu0 0.0
        %646 = vmatpush1.msra.mxu0 0.0
        %647 = vmatprep.subr.mxu0 0.0
        %648 = vmatpush1.msra.mxu0 0.0
        %649 = vmatprep.subr.mxu0 0.0
        %650 = vmatpush1.msra.mxu0 0.0
        %651 = vmatprep.subr.mxu0 0.0
        %652 = vmatpush1.msra.mxu0 0.0
        %653 = vmatprep.subr.mxu0 0.0
        %654 = vmatpush1.msra.mxu0 0.0
        %655 = vmatprep.subr.mxu0 0.0
        %656 = vmatpush1.msra.mxu0 0.0
        %657 = vmatprep.subr.mxu0 0.0
        %658 = vmatpush1.msra.mxu0 0.0
        %659 = vmatprep.subr.mxu0 0.0
        %660 = vmatpush1.msra.mxu0 0.0
        %661 = vmatprep.subr.mxu0 0.0
        %662 = vmatpush1.msra.mxu0 0.0
        %663 = vmatprep.subr.mxu0 0.0
        %664 = vmatpush1.msra.mxu0 0.0
        %665 = vmatprep.subr.mxu0 0.0
        %666 = vmatpush1.msra.mxu0 0.0
        %667 = vmatprep.subr.mxu0 0.0
        %668 = vmatpush1.msra.mxu0 0.0
        %669 = vmatprep.mubr.f32.mxu0 0.0
        %670 = vmatmul.mubr.f32.gmra.mrb[0].mxu0 %v597
        %v671 = vpop.f32.mrb[0].mxu0
        %v672 = vadd.f32 0.0, %v671
        %v673 = vpop.f32.mrb[0].mxu0
        %v674 = vadd.f32 0.0, %v673
        %675 = vdwg.mxu0
        %v676 = vadd.f32 %v570, %v672
        %v677 = vadd.f32 %v571, %v674
        %s678 = scalar_lea.vmem %s1, 32
        %v679 = vld [vmem:[%s678] sm:$0xff]
        %v681 = vsel %vm304, %v679, 0
        %v683 = vsel %vm308, %v252, 0
        %v685 = vsel %vm308, %v254, 0
        %687 = vmatprep.subr.mxu0 %v685
        %688 = vmatpush1.msra.mxu0 %v683
        %689 = vmatprep.subr.mxu0 0.0
        %690 = vmatpush1.msra.mxu0 0.0
        %691 = vmatprep.subr.mxu0 0.0
        %692 = vmatpush1.msra.mxu0 0.0
        %693 = vmatprep.subr.mxu0 0.0
        %694 = vmatpush1.msra.mxu0 0.0
        %695 = vmatprep.subr.mxu0 0.0
        %696 = vmatpush1.msra.mxu0 0.0
        %697 = vmatprep.subr.mxu0 0.0
        %698 = vmatpush1.msra.mxu0 0.0
        %699 = vmatprep.subr.mxu0 0.0
        %700 = vmatpush1.msra.mxu0 0.0
        %701 = vmatprep.subr.mxu0 0.0
        %702 = vmatpush1.msra.mxu0 0.0
        %703 = vmatprep.subr.mxu0 0.0
        %704 = vmatpush1.msra.mxu0 0.0
        %705 = vmatprep.subr.mxu0 0.0
        %706 = vmatpush1.msra.mxu0 0.0
        %707 = vmatprep.subr.mxu0 0.0
        %708 = vmatpush1.msra.mxu0 0.0
        %709 = vmatprep.subr.mxu0 0.0
        %710 = vmatpush1.msra.mxu0 0.0
        %711 = vmatprep.subr.mxu0 0.0
        %712 = vmatpush1.msra.mxu0 0.0
        %713 = vmatprep.subr.mxu0 0.0
        %714 = vmatpush1.msra.mxu0 0.0
        %715 = vmatprep.subr.mxu0 0.0
        %716 = vmatpush1.msra.mxu0 0.0
        %717 = vmatprep.subr.mxu0 0.0
        %718 = vmatpush1.msra.mxu0 0.0
        %719 = vmatprep.subr.mxu0 0.0
        %720 = vmatpush1.msra.mxu0 0.0
        %721 = vmatprep.subr.mxu0 0.0
        %722 = vmatpush1.msra.mxu0 0.0
        %723 = vmatprep.subr.mxu0 0.0
        %724 = vmatpush1.msra.mxu0 0.0
        %725 = vmatprep.subr.mxu0 0.0
        %726 = vmatpush1.msra.mxu0 0.0
        %727 = vmatprep.subr.mxu0 0.0
        %728 = vmatpush1.msra.mxu0 0.0
        %729 = vmatprep.subr.mxu0 0.0
        %730 = vmatpush1.msra.mxu0 0.0
        %731 = vmatprep.subr.mxu0 0.0
        %732 = vmatpush1.msra.mxu0 0.0
        %733 = vmatprep.subr.mxu0 0.0
        %734 = vmatpush1.msra.mxu0 0.0
        %735 = vmatprep.subr.mxu0 0.0
        %736 = vmatpush1.msra.mxu0 0.0
        %737 = vmatprep.subr.mxu0 0.0
        %738 = vmatpush1.msra.mxu0 0.0
        %739 = vmatprep.subr.mxu0 0.0
        %740 = vmatpush1.msra.mxu0 0.0
        %741 = vmatprep.subr.mxu0 0.0
        %742 = vmatpush1.msra.mxu0 0.0
        %743 = vmatprep.subr.mxu0 0.0
        %744 = vmatpush1.msra.mxu0 0.0
        %745 = vmatprep.subr.mxu0 0.0
        %746 = vmatpush1.msra.mxu0 0.0
        %747 = vmatprep.subr.mxu0 0.0
        %748 = vmatpush1.msra.mxu0 0.0
        %749 = vmatprep.subr.mxu0 0.0
        %750 = vmatpush1.msra.mxu0 0.0
        %751 = vmatprep.mubr.f32.mxu0 0.0
        %752 = vmatmul.mubr.f32.gmra.mrb[0].mxu0 %v681
        %v753 = vpop.f32.mrb[0].mxu0
        %v754 = vadd.f32 0.0, %v753
        %v755 = vpop.f32.mrb[0].mxu0
        %v756 = vadd.f32 0.0, %v755
        %757 = vdwg.mxu0
        %v758 = vadd.f32 %v676, %v754
        %v759 = vadd.f32 %v677, %v756
        %760 = vrot.lane.b32.xlu0 %v252, 127
        %v761 = vpop.permute.xlu0 %760
        %762 = vrot.lane.b32.xlu0 %v254, 127
        %v763 = vpop.permute.xlu0 %762
        %vm764 = vcmp.lt.s32.totalorder %v261, 127
        %v765 = vsel %vm764, %v761, %v763
        %v766 = vsel %vm764, %v763, %v761
        %s767 = scalar_lea.vmem %s4, 5
        %v768 = vld [vmem:[%s767] ss:$8 sm:$0x3]
        %v770 = vlaneseq
        %v771 = vshrl.u32 %v770, 7
        %v772 = vsub.s32 0, %v771
        %v773 = vrot.slane %v768, %v772
        %v774 = vlaneseq
        %v775 = vshrl.u32 %v774, 7
        %v776 = vsub.s32 1, %v775
        %v777 = vrot.slane %v768, %v776
        %v780 = vmul.f32 %v765, %v773
        %v781 = vmul.f32 %v766, %v777
        %s782 = scalar_lea.vmem %s1, 40
        %v783 = vld [vmem:[%s782] sm:$0xff]
        %v785 = vsel %vm304, %v783, 0
        %v788 = vsel %vm308, %v780, 0
        %v791 = vsel %vm308, %v781, 0
        %793 = vmatprep.subr.mxu0 %v791
        %794 = vmatpush1.msra.mxu0 %v788
        %795 = vmatprep.subr.mxu0 0.0
        %796 = vmatpush1.msra.mxu0 0.0
        %797 = vmatprep.subr.mxu0 0.0
        %798 = vmatpush1.msra.mxu0 0.0
        %799 = vmatprep.subr.mxu0 0.0
        %800 = vmatpush1.msra.mxu0 0.0
        %801 = vmatprep.subr.mxu0 0.0
        %802 = vmatpush1.msra.mxu0 0.0
        %803 = vmatprep.subr.mxu0 0.0
        %804 = vmatpush1.msra.mxu0 0.0
        %805 = vmatprep.subr.mxu0 0.0
        %806 = vmatpush1.msra.mxu0 0.0
        %807 = vmatprep.subr.mxu0 0.0
        %808 = vmatpush1.msra.mxu0 0.0
        %809 = vmatprep.subr.mxu0 0.0
        %810 = vmatpush1.msra.mxu0 0.0
        %811 = vmatprep.subr.mxu0 0.0
        %812 = vmatpush1.msra.mxu0 0.0
        %813 = vmatprep.subr.mxu0 0.0
        %814 = vmatpush1.msra.mxu0 0.0
        %815 = vmatprep.subr.mxu0 0.0
        %816 = vmatpush1.msra.mxu0 0.0
        %817 = vmatprep.subr.mxu0 0.0
        %818 = vmatpush1.msra.mxu0 0.0
        %819 = vmatprep.subr.mxu0 0.0
        %820 = vmatpush1.msra.mxu0 0.0
        %821 = vmatprep.subr.mxu0 0.0
        %822 = vmatpush1.msra.mxu0 0.0
        %823 = vmatprep.subr.mxu0 0.0
        %824 = vmatpush1.msra.mxu0 0.0
        %825 = vmatprep.subr.mxu0 0.0
        %826 = vmatpush1.msra.mxu0 0.0
        %827 = vmatprep.subr.mxu0 0.0
        %828 = vmatpush1.msra.mxu0 0.0
        %829 = vmatprep.subr.mxu0 0.0
        %830 = vmatpush1.msra.mxu0 0.0
        %831 = vmatprep.subr.mxu0 0.0
        %832 = vmatpush1.msra.mxu0 0.0
        %833 = vmatprep.subr.mxu0 0.0
        %834 = vmatpush1.msra.mxu0 0.0
        %835 = vmatprep.subr.mxu0 0.0
        %836 = vmatpush1.msra.mxu0 0.0
        %837 = vmatprep.subr.mxu0 0.0
        %838 = vmatpush1.msra.mxu0 0.0
        %839 = vmatprep.subr.mxu0 0.0
        %840 = vmatpush1.msra.mxu0 0.0
        %841 = vmatprep.subr.mxu0 0.0
        %842 = vmatpush1.msra.mxu0 0.0
        %843 = vmatprep.subr.mxu0 0.0
        %844 = vmatpush1.msra.mxu0 0.0
        %845 = vmatprep.subr.mxu0 0.0
        %846 = vmatpush1.msra.mxu0 0.0
        %847 = vmatprep.subr.mxu0 0.0
        %848 = vmatpush1.msra.mxu0 0.0
        %849 = vmatprep.subr.mxu0 0.0
        %850 = vmatpush1.msra.mxu0 0.0
        %851 = vmatprep.subr.mxu0 0.0
        %852 = vmatpush1.msra.mxu0 0.0
        %853 = vmatprep.subr.mxu0 0.0
        %854 = vmatpush1.msra.mxu0 0.0
        %855 = vmatprep.subr.mxu0 0.0
        %856 = vmatpush1.msra.mxu0 0.0
        %857 = vmatprep.mubr.f32.mxu0 0.0
        %858 = vmatmul.mubr.f32.gmra.mrb[0].mxu0 %v785
        %v859 = vpop.f32.mrb[0].mxu0
        %v860 = vadd.f32 0.0, %v859
        %v861 = vpop.f32.mrb[0].mxu0
        %v862 = vadd.f32 0.0, %v861
        %863 = vdwg.mxu0
        %v864 = vadd.f32 %v758, %v860
        %v865 = vadd.f32 %v759, %v862
        %866 = vrot.lane.b32.xlu0 %v252, 113
        %v867 = vpop.permute.xlu0 %866
        %868 = vrot.lane.b32.xlu0 %v254, 113
        %v869 = vpop.permute.xlu0 %868
        %vm870 = vcmp.lt.s32.totalorder %v261, 113
        %v871 = vsel %vm870, %v867, %v869
        %v872 = vsel %vm870, %v869, %v867
        %s873 = scalar_lea.vmem %s4, 6
        %v874 = vld [vmem:[%s873] ss:$8 sm:$0x3]
        %v876 = vlaneseq
        %v877 = vshrl.u32 %v876, 7
        %v878 = vsub.s32 0, %v877
        %v879 = vrot.slane %v874, %v878
        %v880 = vlaneseq
        %v881 = vshrl.u32 %v880, 7
        %v882 = vsub.s32 1, %v881
        %v883 = vrot.slane %v874, %v882
        %v886 = vmul.f32 %v871, %v879
        %v887 = vmul.f32 %v872, %v883
        %s888 = scalar_lea.vmem %s1, 48
        %v889 = vld [vmem:[%s888] sm:$0xff]
        %v891 = vsel %vm304, %v889, 0
        %v894 = vsel %vm308, %v886, 0
        %v897 = vsel %vm308, %v887, 0
        %899 = vmatprep.subr.mxu0 %v897
        %900 = vmatpush1.msra.mxu0 %v894
        %901 = vmatprep.subr.mxu0 0.0
        %902 = vmatpush1.msra.mxu0 0.0
        %903 = vmatprep.subr.mxu0 0.0
        %904 = vmatpush1.msra.mxu0 0.0
        %905 = vmatprep.subr.mxu0 0.0
        %906 = vmatpush1.msra.mxu0 0.0
        %907 = vmatprep.subr.mxu0 0.0
        %908 = vmatpush1.msra.mxu0 0.0
        %909 = vmatprep.subr.mxu0 0.0
        %910 = vmatpush1.msra.mxu0 0.0
        %911 = vmatprep.subr.mxu0 0.0
        %912 = vmatpush1.msra.mxu0 0.0
        %913 = vmatprep.subr.mxu0 0.0
        %914 = vmatpush1.msra.mxu0 0.0
        %915 = vmatprep.subr.mxu0 0.0
        %916 = vmatpush1.msra.mxu0 0.0
        %917 = vmatprep.subr.mxu0 0.0
        %918 = vmatpush1.msra.mxu0 0.0
        %919 = vmatprep.subr.mxu0 0.0
        %920 = vmatpush1.msra.mxu0 0.0
        %921 = vmatprep.subr.mxu0 0.0
        %922 = vmatpush1.msra.mxu0 0.0
        %923 = vmatprep.subr.mxu0 0.0
        %924 = vmatpush1.msra.mxu0 0.0
        %925 = vmatprep.subr.mxu0 0.0
        %926 = vmatpush1.msra.mxu0 0.0
        %927 = vmatprep.subr.mxu0 0.0
        %928 = vmatpush1.msra.mxu0 0.0
        %929 = vmatprep.subr.mxu0 0.0
        %930 = vmatpush1.msra.mxu0 0.0
        %931 = vmatprep.subr.mxu0 0.0
        %932 = vmatpush1.msra.mxu0 0.0
        %933 = vmatprep.subr.mxu0 0.0
        %934 = vmatpush1.msra.mxu0 0.0
        %935 = vmatprep.subr.mxu0 0.0
        %936 = vmatpush1.msra.mxu0 0.0
        %937 = vmatprep.subr.mxu0 0.0
        %938 = vmatpush1.msra.mxu0 0.0
        %939 = vmatprep.subr.mxu0 0.0
        %940 = vmatpush1.msra.mxu0 0.0
        %941 = vmatprep.subr.mxu0 0.0
        %942 = vmatpush1.msra.mxu0 0.0
        %943 = vmatprep.subr.mxu0 0.0
        %944 = vmatpush1.msra.mxu0 0.0
        %945 = vmatprep.subr.mxu0 0.0
        %946 = vmatpush1.msra.mxu0 0.0
        %947 = vmatprep.subr.mxu0 0.0
        %948 = vmatpush1.msra.mxu0 0.0
        %949 = vmatprep.subr.mxu0 0.0
        %950 = vmatpush1.msra.mxu0 0.0
        %951 = vmatprep.subr.mxu0 0.0
        %952 = vmatpush1.msra.mxu0 0.0
        %953 = vmatprep.subr.mxu0 0.0
        %954 = vmatpush1.msra.mxu0 0.0
        %955 = vmatprep.subr.mxu0 0.0
        %956 = vmatpush1.msra.mxu0 0.0
        %957 = vmatprep.subr.mxu0 0.0
        %958 = vmatpush1.msra.mxu0 0.0
        %959 = vmatprep.subr.mxu0 0.0
        %960 = vmatpush1.msra.mxu0 0.0
        %961 = vmatprep.subr.mxu0 0.0
        %962 = vmatpush1.msra.mxu0 0.0
        %963 = vmatprep.mubr.f32.mxu0 0.0
        %964 = vmatmul.mubr.f32.gmra.mrb[0].mxu0 %v891
        %v965 = vpop.f32.mrb[0].mxu0
        %v966 = vadd.f32 0.0, %v965
        %v967 = vpop.f32.mrb[0].mxu0
        %v968 = vadd.f32 0.0, %v967
        %969 = vdwg.mxu0
        %v970 = vadd.f32 %v864, %v966
        %v971 = vadd.f32 %v865, %v968
        %972 = vrot.lane.b32.xlu0 %v252, 112
        %v973 = vpop.permute.xlu0 %972
        %974 = vrot.lane.b32.xlu0 %v254, 112
        %v975 = vpop.permute.xlu0 %974
        %vm976 = vcmp.lt.s32.totalorder %v261, 112
        %v977 = vsel %vm976, %v973, %v975
        %v978 = vsel %vm976, %v975, %v973
        %s979 = scalar_lea.vmem %s4, 7
        %v980 = vld [vmem:[%s979] ss:$8 sm:$0x3]
        %v982 = vlaneseq
        %v983 = vshrl.u32 %v982, 7
        %v984 = vsub.s32 0, %v983
        %v985 = vrot.slane %v980, %v984
        %v986 = vlaneseq
        %v987 = vshrl.u32 %v986, 7
        %v988 = vsub.s32 1, %v987
        %v989 = vrot.slane %v980, %v988
        %v992 = vmul.f32 %v977, %v985
        %v993 = vmul.f32 %v978, %v989
        %s994 = scalar_lea.vmem %s1, 56
        %v995 = vld [vmem:[%s994] sm:$0xff]
        %v997 = vsel %vm304, %v995, 0
        %v1000 = vsel %vm308, %v992, 0
        %v1003 = vsel %vm308, %v993, 0
        %1005 = vmatprep.subr.mxu0 %v1003
        %1006 = vmatpush1.msra.mxu0 %v1000
        %1007 = vmatprep.subr.mxu0 0.0
        %1008 = vmatpush1.msra.mxu0 0.0
        %1009 = vmatprep.subr.mxu0 0.0
        %1010 = vmatpush1.msra.mxu0 0.0
        %1011 = vmatprep.subr.mxu0 0.0
        %1012 = vmatpush1.msra.mxu0 0.0
        %1013 = vmatprep.subr.mxu0 0.0
        %1014 = vmatpush1.msra.mxu0 0.0
        %1015 = vmatprep.subr.mxu0 0.0
        %1016 = vmatpush1.msra.mxu0 0.0
        %1017 = vmatprep.subr.mxu0 0.0
        %1018 = vmatpush1.msra.mxu0 0.0
        %1019 = vmatprep.subr.mxu0 0.0
        %1020 = vmatpush1.msra.mxu0 0.0
        %1021 = vmatprep.subr.mxu0 0.0
        %1022 = vmatpush1.msra.mxu0 0.0
        %1023 = vmatprep.subr.mxu0 0.0
        %1024 = vmatpush1.msra.mxu0 0.0
        %1025 = vmatprep.subr.mxu0 0.0
        %1026 = vmatpush1.msra.mxu0 0.0
        %1027 = vmatprep.subr.mxu0 0.0
        %1028 = vmatpush1.msra.mxu0 0.0
        %1029 = vmatprep.subr.mxu0 0.0
        %1030 = vmatpush1.msra.mxu0 0.0
        %1031 = vmatprep.subr.mxu0 0.0
        %1032 = vmatpush1.msra.mxu0 0.0
        %1033 = vmatprep.subr.mxu0 0.0
        %1034 = vmatpush1.msra.mxu0 0.0
        %1035 = vmatprep.subr.mxu0 0.0
        %1036 = vmatpush1.msra.mxu0 0.0
        %1037 = vmatprep.subr.mxu0 0.0
        %1038 = vmatpush1.msra.mxu0 0.0
        %1039 = vmatprep.subr.mxu0 0.0
        %1040 = vmatpush1.msra.mxu0 0.0
        %1041 = vmatprep.subr.mxu0 0.0
        %1042 = vmatpush1.msra.mxu0 0.0
        %1043 = vmatprep.subr.mxu0 0.0
        %1044 = vmatpush1.msra.mxu0 0.0
        %1045 = vmatprep.subr.mxu0 0.0
        %1046 = vmatpush1.msra.mxu0 0.0
        %1047 = vmatprep.subr.mxu0 0.0
        %1048 = vmatpush1.msra.mxu0 0.0
        %1049 = vmatprep.subr.mxu0 0.0
        %1050 = vmatpush1.msra.mxu0 0.0
        %1051 = vmatprep.subr.mxu0 0.0
        %1052 = vmatpush1.msra.mxu0 0.0
        %1053 = vmatprep.subr.mxu0 0.0
        %1054 = vmatpush1.msra.mxu0 0.0
        %1055 = vmatprep.subr.mxu0 0.0
        %1056 = vmatpush1.msra.mxu0 0.0
        %1057 = vmatprep.subr.mxu0 0.0
        %1058 = vmatpush1.msra.mxu0 0.0
        %1059 = vmatprep.subr.mxu0 0.0
        %1060 = vmatpush1.msra.mxu0 0.0
        %1061 = vmatprep.subr.mxu0 0.0
        %1062 = vmatpush1.msra.mxu0 0.0
        %1063 = vmatprep.subr.mxu0 0.0
        %1064 = vmatpush1.msra.mxu0 0.0
        %1065 = vmatprep.subr.mxu0 0.0
        %1066 = vmatpush1.msra.mxu0 0.0
        %1067 = vmatprep.subr.mxu0 0.0
        %1068 = vmatpush1.msra.mxu0 0.0
        %1069 = vmatprep.mubr.f32.mxu0 0.0
        %1070 = vmatmul.mubr.f32.gmra.mrb[0].mxu0 %v997
        %v1071 = vpop.f32.mrb[0].mxu0
        %v1072 = vadd.f32 0.0, %v1071
        %v1073 = vpop.f32.mrb[0].mxu0
        %v1074 = vadd.f32 0.0, %v1073
        %1075 = vdwg.mxu0
        %v1076 = vadd.f32 %v970, %v1072
        %v1077 = vadd.f32 %v971, %v1074
        %1078 = vrot.lane.b32.xlu0 %v252, 111
        %v1079 = vpop.permute.xlu0 %1078
        %1080 = vrot.lane.b32.xlu0 %v254, 111
        %v1081 = vpop.permute.xlu0 %1080
        %vm1082 = vcmp.lt.s32.totalorder %v261, 111
        %v1083 = vsel %vm1082, %v1079, %v1081
        %v1084 = vsel %vm1082, %v1081, %v1079
        %s1085 = scalar_lea.vmem %s4, 16
        %v1086 = vld [vmem:[%s1085] ss:$8 sm:$0x3]
        %v1088 = vlaneseq
        %v1089 = vshrl.u32 %v1088, 7
        %v1090 = vsub.s32 0, %v1089
        %v1091 = vrot.slane %v1086, %v1090
        %v1092 = vlaneseq
        %v1093 = vshrl.u32 %v1092, 7
        %v1094 = vsub.s32 1, %v1093
        %v1095 = vrot.slane %v1086, %v1094
        %v1098 = vmul.f32 %v1083, %v1091
        %v1099 = vmul.f32 %v1084, %v1095
        %s1100 = scalar_lea.vmem %s1, 64
        %v1101 = vld [vmem:[%s1100] sm:$0xff]
        %v1103 = vsel %vm304, %v1101, 0
        %v1106 = vsel %vm308, %v1098, 0
        %v1109 = vsel %vm308, %v1099, 0
        %1111 = vmatprep.subr.mxu0 %v1109
        %1112 = vmatpush1.msra.mxu0 %v1106
        %1113 = vmatprep.subr.mxu0 0.0
        %1114 = vmatpush1.msra.mxu0 0.0
        %1115 = vmatprep.subr.mxu0 0.0
        %1116 = vmatpush1.msra.mxu0 0.0
        %1117 = vmatprep.subr.mxu0 0.0
        %1118 = vmatpush1.msra.mxu0 0.0
        %1119 = vmatprep.subr.mxu0 0.0
        %1120 = vmatpush1.msra.mxu0 0.0
        %1121 = vmatprep.subr.mxu0 0.0
        %1122 = vmatpush1.msra.mxu0 0.0
        %1123 = vmatprep.subr.mxu0 0.0
        %1124 = vmatpush1.msra.mxu0 0.0
        %1125 = vmatprep.subr.mxu0 0.0
        %1126 = vmatpush1.msra.mxu0 0.0
        %1127 = vmatprep.subr.mxu0 0.0
        %1128 = vmatpush1.msra.mxu0 0.0
        %1129 = vmatprep.subr.mxu0 0.0
        %1130 = vmatpush1.msra.mxu0 0.0
        %1131 = vmatprep.subr.mxu0 0.0
        %1132 = vmatpush1.msra.mxu0 0.0
        %1133 = vmatprep.subr.mxu0 0.0
        %1134 = vmatpush1.msra.mxu0 0.0
        %1135 = vmatprep.subr.mxu0 0.0
        %1136 = vmatpush1.msra.mxu0 0.0
        %1137 = vmatprep.subr.mxu0 0.0
        %1138 = vmatpush1.msra.mxu0 0.0
        %1139 = vmatprep.subr.mxu0 0.0
        %1140 = vmatpush1.msra.mxu0 0.0
        %1141 = vmatprep.subr.mxu0 0.0
        %1142 = vmatpush1.msra.mxu0 0.0
        %1143 = vmatprep.subr.mxu0 0.0
        %1144 = vmatpush1.msra.mxu0 0.0
        %1145 = vmatprep.subr.mxu0 0.0
        %1146 = vmatpush1.msra.mxu0 0.0
        %1147 = vmatprep.subr.mxu0 0.0
        %1148 = vmatpush1.msra.mxu0 0.0
        %1149 = vmatprep.subr.mxu0 0.0
        %1150 = vmatpush1.msra.mxu0 0.0
        %1151 = vmatprep.subr.mxu0 0.0
        %1152 = vmatpush1.msra.mxu0 0.0
        %1153 = vmatprep.subr.mxu0 0.0
        %1154 = vmatpush1.msra.mxu0 0.0
        %1155 = vmatprep.subr.mxu0 0.0
        %1156 = vmatpush1.msra.mxu0 0.0
        %1157 = vmatprep.subr.mxu0 0.0
        %1158 = vmatpush1.msra.mxu0 0.0
        %1159 = vmatprep.subr.mxu0 0.0
        %1160 = vmatpush1.msra.mxu0 0.0
        %1161 = vmatprep.subr.mxu0 0.0
        %1162 = vmatpush1.msra.mxu0 0.0
        %1163 = vmatprep.subr.mxu0 0.0
        %1164 = vmatpush1.msra.mxu0 0.0
        %1165 = vmatprep.subr.mxu0 0.0
        %1166 = vmatpush1.msra.mxu0 0.0
        %1167 = vmatprep.subr.mxu0 0.0
        %1168 = vmatpush1.msra.mxu0 0.0
        %1169 = vmatprep.subr.mxu0 0.0
        %1170 = vmatpush1.msra.mxu0 0.0
        %1171 = vmatprep.subr.mxu0 0.0
        %1172 = vmatpush1.msra.mxu0 0.0
        %1173 = vmatprep.subr.mxu0 0.0
        %1174 = vmatpush1.msra.mxu0 0.0
        %1175 = vmatprep.mubr.f32.mxu0 0.0
        %1176 = vmatmul.mubr.f32.gmra.mrb[0].mxu0 %v1103
        %v1177 = vpop.f32.mrb[0].mxu0
        %v1178 = vadd.f32 0.0, %v1177
        %v1179 = vpop.f32.mrb[0].mxu0
        %v1180 = vadd.f32 0.0, %v1179
        %1181 = vdwg.mxu0
        %v1182 = vadd.f32 %v1076, %v1178
        %v1183 = vadd.f32 %v1077, %v1180
        %1184 = vst [vmem:[%s217] sm:$0xff] %v1182
        %1185 = vst [vmem:[%s217 + $0x8] sm:$0xff] %v1183
        %s1186 = sand.u32 %s137, 1
        %s1187 = scalar_lea.sflag [#allocation3], %s1186
        %s1188 = sand.u32 %s137, 1
        %s1189 = smul.addr %s1188, 16
        %s1190 = scalar_lea.vmem [#allocation2], %s1189
        // Predicated region
        $region41: #{tpu_custom_call.1} parent=39 // pred_check
          %p1191 = pneg %p147
        $region42: #{tpu_custom_call.1} parent=39 // pred_check_branch
          %1193 = sbr.rel (%p1191) target = $region44
        $region43: #{tpu_custom_call.1} parent=39 // pred_region
          %s1195 = ssub.s32 256, 256
          %1196 = vsyncadd %s1187, %s1195
          %s1197 = smul.addr %s19, 2
          %s1198 = smul.addr %s1197, 128
          %s1199 = scalar_lea.hbm %s5, %s1198
          %s1201 = sshll.u32 %s1190, 4
          %s1202 = int_to_ptr.vmem [resolvable:$true] %s1201
          %1204 = dma.vmem_to_hbm [thread:$0]  %s1202, 256, %s1199, %s1187
        $region44: #{tpu_custom_call.1} parent=39 // pred_fallthru
          _
      $region40: #{tpu_custom_call.1} parent=5 // pred_fallthru
        _
      %p1205 = scmp.le.s32.totalorder 2, %s14
      // Predicated region
      $region45: #{tpu_custom_call.1} parent=5 // pred_check
        %p1206 = pneg %p1205
      $region46: #{tpu_custom_call.1} parent=5 // pred_check_branch
        %1208 = sbr.rel (%p1206) target = $region48
      $region47: #{tpu_custom_call.1} parent=5 // pred_region
        %s1209 = ssub.s32 %s14, 2
        // Predicated region
        $region49: #{tpu_custom_call.1} parent=47 // pred_check
          %p1210 = pneg %p153
        $region50: #{tpu_custom_call.1} parent=47 // pred_check_branch
          %1212 = sbr.rel (%p1210) target = $region52
        $region51: #{tpu_custom_call.1} parent=47 // pred_region
          %s1213 = sand.u32 %s138, 1
          %s1214 = scalar_lea.sflag [#allocation3], %s1213
          %s1215 = sand.u32 %s138, 1
          %s1216 = smul.addr %s1215, 16
          %s1217 = scalar_lea.vmem [#allocation2], %s1216
          %1218 = dma.done %s1214, 256
        $region52: #{tpu_custom_call.1} parent=47 // pred_fallthru
          _
      $region48: #{tpu_custom_call.1} parent=5 // pred_fallthru
        _
    $region6: #{tpu_custom_call.1} parent=1 // loop_footer
      %s18 = sadd.s32 1, %s14
    $region7: #{tpu_custom_call.1} parent=1 // loop_footer_branch
      %13 = sbr.rel target = $region3
    $region8: #{tpu_custom_call.1} parent=1 // loop_exit
      _
    %1219 = vsyncpa [#allocation3], 1
    %s1220 = scalar_lea.sflag [#allocation3], 1
    %1221 = vsyncpa %s1220, 1

</llo_original>
